<compile_context>
chip_gen: v5e
topology: v5e:2x2
jax: 0.10.0
libtpu: 0.0.40
codegen_flags: <defaults>
</compile_context>

<pallas_src>
import functools

import jax
import jax.numpy as jnp
from jax import lax
from jax.experimental import pallas as pl
from jax.experimental.pallas import tpu as pltpu

_LANE = 128
# (1e-12)^2: clamping the sum-of-squares == torch's  x / max(||x||, 1e-12).
_EPS_SQ = 1e-24  # plain Python float — must NOT be a jnp constant (kernel closure capture)


def _minerva_activation(a, p_factor):
    """sign(a) * |a|^p.  For small integer p this is pure VPU multiplies (no EUP pow)."""
    p = float(p_factor)
    if p == int(p) and 1 <= int(p) <= 8:
        p_int = int(p)
        out = a if (p_int % 2 == 1) else jnp.abs(a)   # odd p: a^p ; even p: |a| * a^(p-1)
        for _ in range(p_int - 1):
            out = out * a
        return out
    # Fractional p: EUP log/exp path (Python-float exponent, no captured array constant).
    return jnp.sign(a) * jnp.power(jnp.abs(a), p)


def _prep_kernel(d_ref, wg_ref, bg_ref, dn_ref):
    """Exemplar-side preprocessing, run once: dn = l2norm(D @ Wg.T + bg) in matmul dtype."""
    D = d_ref[...].astype(jnp.float32)               # (tm, F)
    Wg = wg_ref[...].astype(jnp.float32)             # (E, F)
    De = lax.dot_general(D, Wg, (((1,), (1,)), ((), ())),
                         preferred_element_type=jnp.float32)      # (tm, E)
    De = De + bg_ref[...]
    ss = jnp.sum(De * De, axis=1, keepdims=True)
    dn = De * lax.rsqrt(jnp.maximum(ss, _EPS_SQ))
    dn_ref[...] = dn.astype(dn_ref.dtype)


def _main_kernel(x_ref, wg_ref, bg_ref, dn_ref, r_ref, wh_ref, bh_ref,
                 logits_ref, xn_sc, echo_r_sc, echo_1_sc, *, p_factor):
    k = pl.program_id(1)
    last_k = pl.num_programs(1) - 1

    # Per-N-tile work only at the first reduction step.
    @pl.when(k == 0)
    def _():
        X = x_ref[...].astype(jnp.float32)            # (tn, F)
        Wg = wg_ref[...].astype(jnp.float32)          # (E, F)
        Xe = lax.dot_general(X, Wg, (((1,), (1,)), ((), ())),
                             preferred_element_type=jnp.float32)  # (tn, E)
        Xe = Xe + bg_ref[...]
        ss = jnp.sum(Xe * Xe, axis=1, keepdims=True)
        xn = Xe * lax.rsqrt(jnp.maximum(ss, _EPS_SQ))
        xn_sc[...] = xn.astype(xn_sc.dtype)           # stored in matmul dtype once
        echo_r_sc[...] = jnp.zeros_like(echo_r_sc)
        echo_1_sc[...] = jnp.zeros_like(echo_1_sc)

    # Similarity block (tn, tm): bf16 (default) MXU matmul with f32 accumulation.
    a = lax.dot_general(xn_sc[...], dn_ref[...], (((1,), (1,)), ((), ())),
                        preferred_element_type=jnp.float32)       # (tn, tm) f32
    a = _minerva_activation(a, p_factor)

    # Echo reduction on the VPU/XLU (no width-2 MXU matmul): rank-1 head decomposition
    #   echo[n, c] = Wh[c] * sum_m a[n,m]*r'[m]  +  bh[c] * sum_m a[n,m]
    rrow = r_ref[...]                                             # (1, tm) f32, r' = 2r-1
    echo_r_sc[...] += jnp.sum(a * rrow, axis=1, keepdims=True)    # (tn, 1)
    echo_1_sc[...] += jnp.sum(a, axis=1, keepdims=True)           # (tn, 1)

    # Finalize: head applied as a VPU broadcast, stored into one lane-dense block.
    @pl.when(k == last_k)
    def _():
        logits_ref[...] = (echo_r_sc[...] * wh_ref[...]
                           + echo_1_sc[...] * bh_ref[...])        # (tn, c_pad)


def make_minerva_forward(p_factor, *, tile_n=256, tile_m=512,
                         matmul_dtype=jnp.bfloat16, vmem_limit_bytes=None):
    """Builds the forward pass.

    `matmul_dtype=jnp.bfloat16` (default) runs the similarity matmul at MXU-native rate with
    f32 accumulation — loosen test tolerances accordingly; pass jnp.float32 for bit-tight
    checks.  Tile sizes / vmem_limit_bytes should be re-derived per chip: v7x has 64 MiB
    physical VMEM (vs 128 MiB on v5e/v6e), so set vmem_limit_bytes explicitly there
    (e.g. pltpu.get_tpu_info().vmem_capacity_bytes) before scaling tiles up.
    """

    def forward(X, D, Wg, bg, r, Wh, bh):
        N, F = X.shape
        M = D.shape[0]
        E = Wg.shape[0]
        C = Wh.shape[0]

        tn = min(tile_n, N)
        # v7x megacore load balance: keep enough (and even) programs on the parallel axis.
        while (N // tn) < 4 and tn > 128 and tn % 2 == 0 and N % (tn // 2) == 0:
            tn //= 2
        tm = min(tile_m, M)
        assert N % tn == 0 and M % tm == 0, "N and M must be divisible by the tile sizes"
        # r' is consumed as a (1, tm) lane block -> tm must be lane-aligned unless tm == M.
        assert tm == M or tm % _LANE == 0, "tile_m must be a multiple of 128 (or equal M)"
        c_pad = _LANE * pl.cdiv(C, _LANE)   # lane-dense output width

        bg2 = bg.reshape(1, E).astype(jnp.float32)
        # Construction-time buffer transform of the torch module (ex_correct*2-1), done once.
        r_row = (r.reshape(1, M).astype(jnp.float32) * 2.0 - 1.0)
        wh_row = jnp.zeros((1, c_pad), jnp.float32).at[0, :C].set(
            Wh.reshape(C).astype(jnp.float32))
        bh_row = jnp.zeros((1, c_pad), jnp.float32).at[0, :C].set(
            bh.reshape(C).astype(jnp.float32))

        cparams_prep = pltpu.CompilerParams(
            dimension_semantics=("parallel",), vmem_limit_bytes=vmem_limit_bytes)
        cparams_main = pltpu.CompilerParams(
            dimension_semantics=("parallel", "arbitrary"),
            vmem_limit_bytes=vmem_limit_bytes)

        # ---- Pass 1: exemplar-side preprocessing (runs once, gridded over M) ----
        dn = pl.pallas_call(
            _prep_kernel,
            out_shape=jax.ShapeDtypeStruct((M, E), matmul_dtype),
            grid=(M // tm,),
            in_specs=[
                pl.BlockSpec((tm, F), lambda m: (m, 0)),   # D
                pl.BlockSpec((E, F), lambda m: (0, 0)),    # Wg
                pl.BlockSpec((1, E), lambda m: (0, 0)),    # bg
            ],
            out_specs=pl.BlockSpec((tm, E), lambda m: (m, 0)),   # dn (matmul dtype)
            compiler_params=cparams_prep,
        )(D, Wg, bg2)

        # ---- Pass 2: tiled similarity + Minerva reduction over M ----
        kern = functools.partial(_main_kernel, p_factor=p_factor)
        logits_pad = pl.pallas_call(
            kern,
            out_shape=jax.ShapeDtypeStruct((N, c_pad), jnp.float32),
            grid=(N // tn, M // tm),
            in_specs=[
                pl.BlockSpec((tn, F), lambda i, k: (i, 0)),      # X
                pl.BlockSpec((E, F), lambda i, k: (0, 0)),       # Wg
                pl.BlockSpec((1, E), lambda i, k: (0, 0)),       # bg
                pl.BlockSpec((tm, E), lambda i, k: (k, 0)),      # dn (precomputed, mm dtype)
                pl.BlockSpec((1, tm), lambda i, k: (0, k)),      # r' row (2r-1)
                pl.BlockSpec((1, c_pad), lambda i, k: (0, 0)),   # Wh (padded row)
                pl.BlockSpec((1, c_pad), lambda i, k: (0, 0)),   # bh (padded row)
            ],
            out_specs=pl.BlockSpec((tn, c_pad), lambda i, k: (i, 0)),
            scratch_shapes=[
                pltpu.VMEM((tn, E), matmul_dtype),   # xn (resident across the M reduction)
                pltpu.VMEM((tn, 1), jnp.float32),    # echo_r accumulator (sum a*r')
                pltpu.VMEM((tn, 1), jnp.float32),    # echo_1 accumulator (sum a)
            ],
            compiler_params=cparams_main,
        )(X, Wg, bg2, dn, r_row, wh_row, bh_row)

        logits = logits_pad[:, :C]
        # sigmoid on (N, C) in the wrapper: avoids a second (N, c_pad) padded HBM output.
        preds = jax.nn.sigmoid(logits)
        # TODO(synk): g=None / h=None configuration branches of minerva_transform are not
        # implemented (kernel assumes both feature and class embeddings are present).
        return {"logits": logits, "preds": preds}

    return forward


def reference_forward(X, D, Wg, bg, r, Wh, bh, p_factor):
    """Pure-JAX reference matching the torch module."""
    Xe = X @ Wg.T + bg[None, :]
    De = D @ Wg.T + bg[None, :]
    rv = r * 2.0 - 1.0                      # buffer transform from __init__
    re = rv @ Wh.T + bh[None, :]            # h applied to r before Minerva
    eps = 1e-12
    xn = Xe / jnp.maximum(jnp.linalg.norm(Xe, axis=1, keepdims=True), eps)
    dn = De / jnp.maximum(jnp.linalg.norm(De, axis=1, keepdims=True), eps)
    a = xn @ dn.T
    a = jnp.sign(a) * jnp.abs(a) ** p_factor
    echo = a @ re
    return echo, jax.nn.sigmoid(echo)


if __name__ == "__main__":
    # Small deterministic shapes consistent with the module.
    N = 32           # batch of query feature vectors
    M = 256          # number of exemplars (rows of D, r)
    FEAT_DIM = 32    # args.feat_dim
    EMBED_DIM = 16   # args.feat_embed_dim
    CLASS_DIM = 4    # args.class_embed_dim
    P_FACTOR = 3.0   # args.p_factor

    key = jax.random.PRNGKey(0)
    kx, kd, kg, kbg, kr, kwh, kbh = jax.random.split(key, 7)

    X = jax.random.normal(kx, (N, FEAT_DIM), dtype=jnp.float32)
    D = jax.random.normal(kd, (M, FEAT_DIM), dtype=jnp.float32)          # ex_feats (Dr)
    bound_g = 1.0 / (FEAT_DIM ** 0.5)
    # torch Linear weights are (out_features, in_features)
    Wg = jax.random.uniform(kg, (EMBED_DIM, FEAT_DIM), jnp.float32, -bound_g, bound_g)
    bg = jax.random.uniform(kbg, (EMBED_DIM,), jnp.float32, -bound_g, bound_g)
    r = jax.random.uniform(kr, (M, 1), jnp.float32, 0.0, 1.0)            # ex_correct in [0,1]
    Wh = jax.random.uniform(kwh, (CLASS_DIM, 1), jnp.float32, -1.0, 1.0)
    bh = jax.random.uniform(kbh, (CLASS_DIM,), jnp.float32, -1.0, 1.0)

    ref_logits, ref_preds = reference_forward(X, D, Wg, bg, r, Wh, bh, P_FACTOR)

    # Small tiles so the demo exercises a (2, 2) grid with M-axis accumulation.
    # 1) f32 matmul path: bit-tight check of the kernel structure.
    fwd_f32 = make_minerva_forward(P_FACTOR, tile_n=16, tile_m=128,
                                   matmul_dtype=jnp.float32)
    out_f32 = fwd_f32(X, D, Wg, bg, r, Wh, bh)
    jax.block_until_ready(out_f32)
    assert out_f32["logits"].shape == (N, CLASS_DIM)
    assert out_f32["preds"].shape == (N, CLASS_DIM)
    assert jnp.allclose(out_f32["logits"], ref_logits, atol=1e-4, rtol=1e-4), \
        float(jnp.max(jnp.abs(out_f32["logits"] - ref_logits)))
    assert jnp.allclose(out_f32["preds"], ref_preds, atol=1e-4, rtol=1e-4)

    # 2) Default bf16 matmul path (MXU-native throughput): loose tolerances.
    fwd_bf16 = make_minerva_forward(P_FACTOR, tile_n=16, tile_m=128)
    out_bf16 = fwd_bf16(X, D, Wg, bg, r, Wh, bh)
    jax.block_until_ready(out_bf16)
    assert out_bf16["logits"].shape == (N, CLASS_DIM)
    assert jnp.allclose(out_bf16["logits"], ref_logits, atol=2e-1, rtol=5e-2), \
        float(jnp.max(jnp.abs(out_bf16["logits"] - ref_logits)))
    assert jnp.allclose(out_bf16["preds"], ref_preds, atol=1e-1, rtol=5e-2)

    print("KERNEL_OK")
</pallas_src>

<mosaic_0001>
module attributes {stable_mosaic.version = 11 : i64} {
  func.func @_prep_kernel(%arg0: i32, %arg1: memref<128x32xf32, #tpu.memory_space<vmem>>, %arg2: memref<16x32xf32, #tpu.memory_space<vmem>>, %arg3: memref<1x16xf32, #tpu.memory_space<vmem>>, %arg4: memref<128x16xf32, #tpu.memory_space<vmem>>) attributes {dimension_semantics = [#tpu.dimension_semantics<parallel>], iteration_bounds = array<i64: 2>, scalar_prefetch = 0 : i64, scratch_operands = 0 : i64, tpu.core_type = #tpu.core_type<tc>, window_params = [{transform_indices = @transform_0, window_bounds = array<i64: 128, 32>}, {pipeline_mode = #tpu.pipeline_mode<synchronous>, transform_indices = @transform_1, window_bounds = array<i64: 16, 32>}, {pipeline_mode = #tpu.pipeline_mode<synchronous>, transform_indices = @transform_2, window_bounds = array<i64: 1, 16>}, {transform_indices = @transform_3, window_bounds = array<i64: 128, 16>}]} {
    %c0 = arith.constant 0 : index
    %c0_0 = arith.constant 0 : index
    %0 = vector.load %arg1[%c0, %c0_0] : memref<128x32xf32, #tpu.memory_space<vmem>>, vector<128x32xf32>
    %c0_1 = arith.constant 0 : index
    %c0_2 = arith.constant 0 : index
    %1 = vector.load %arg2[%c0_1, %c0_2] : memref<16x32xf32, #tpu.memory_space<vmem>>, vector<16x32xf32>
    %cst = arith.constant dense<0.000000e+00> : vector<128x16xf32>
    %2 = tpu.matmul %0, %1, %cst {dimension_numbers = #tpu.dot_dimension_numbers<[1], [1], [0], [0], [0, 0, 1, 0], [], []>} : vector<128x32xf32>, vector<16x32xf32>, vector<128x16xf32> -> vector<128x16xf32>
    %c0_3 = arith.constant 0 : index
    %c0_4 = arith.constant 0 : index
    %3 = vector.load %arg3[%c0_3, %c0_4] : memref<1x16xf32, #tpu.memory_space<vmem>>, vector<1x16xf32>
    %4 = vector.broadcast %3 : vector<1x16xf32> to vector<128x16xf32>
    %5 = arith.addf %2, %4 : vector<128x16xf32>
    %6 = arith.mulf %5, %5 : vector<128x16xf32>
    %cst_5 = arith.constant dense<0.000000e+00> : vector<128xf32>
    %7 = vector.multi_reduction <add>, %6, %cst_5 [1] : vector<128x16xf32> to vector<128xf32>
    %8 = vector.shape_cast %7 : vector<128xf32> to vector<128x1xf32>
    %cst_6 = arith.constant 1.000000e-24 : f32
    %9 = vector.broadcast %cst_6 : f32 to vector<128x1xf32>
    %10 = arith.maximumf %8, %9 : vector<128x1xf32>
    %11 = math.rsqrt %10 : vector<128x1xf32>
    %12 = vector.broadcast %11 : vector<128x1xf32> to vector<128x16xf32>
    %13 = arith.mulf %5, %12 : vector<128x16xf32>
    %c0_7 = arith.constant 0 : index
    %c0_8 = arith.constant 0 : index
    %14 = vector.load %arg4[%c0_7, %c0_8] : memref<128x16xf32, #tpu.memory_space<vmem>>, vector<128x16xf32>
    tpu.vector_store %arg4[%c0_7, %c0_8], %13 {strides = array<i32>} : memref<128x16xf32, #tpu.memory_space<vmem>>, vector<128x16xf32>,
    return
  }
  func.func @transform_0(%arg0: i32) -> (i32, i32) {
    %c0_i32 = arith.constant 0 : i32
    %c0_i32_0 = arith.constant 0 : i32
    return %arg0, %c0_i32 : i32, i32
  }
  func.func @transform_1(%arg0: i32) -> (i32, i32) {
    %c0_i32 = arith.constant 0 : i32
    %c0_i32_0 = arith.constant 0 : i32
    %c0_i32_1 = arith.constant 0 : i32
    return %c0_i32, %c0_i32_0 : i32, i32
  }
  func.func @transform_2(%arg0: i32) -> (i32, i32) {
    %c0_i32 = arith.constant 0 : i32
    %c0_i32_0 = arith.constant 0 : i32
    %c0_i32_1 = arith.constant 0 : i32
    return %c0_i32, %c0_i32_0 : i32, i32
  }
  func.func @transform_3(%arg0: i32) -> (i32, i32) {
    %c0_i32 = arith.constant 0 : i32
    %c0_i32_0 = arith.constant 0 : i32
    return %arg0, %c0_i32 : i32, i32
  }
}

</mosaic_0001>

<llo_original>
// kernel: tpu_custom_call.1
$region0: #{tpu_custom_call.1}
  #allocation0 [shape = 'u32[]', space=smem, size = 0x4, offset = 0x4, fixed_abs, tag = 'smem constant byte address 0x4 - core index']
  #allocation1 [shape = 'u32[72,128]{1,0:T(1,128)}', space=vmem, size = 0x9000, scoped, tag = 'internal scratch']
  %s0 = inlined_call_operand.vmem [shape: f32[256,32], index: 0, kind: input, shape index: {}]
  %s1 = inlined_call_operand.vmem [shape: f32[16,32], index: 1, kind: input, shape index: {}]
  %s2 = inlined_call_operand.vmem [shape: f32[1,16], index: 2, kind: input, shape index: {}]
  %s3 = inlined_call_operand.vmem [shape: f32[256,16], index: 3, kind: output, shape index: {}]
  %s4 = sld [smem:[#allocation0]]
  $region45: #{tpu_custom_call.1} parent=0
    _
  %s6 = ssub.s32 1, %s4
  %s7 = scalar_select 0, %s6, %s4
  loop: start=0, step=1, limit=4
  $region2: #{tpu_custom_call.1} parent=0 // loop_pre_header
    _
  $region3: #{tpu_custom_call.1} parent=0 // loop_header
    %s9 = sphi 0, %s13
    %p10 = scmp.ge.s32.totalorder %s9, 4
    %s19 = sphi 0, %s21
    %s22 = sphi 0, %s19
    %s23 = sphi 0, %s22
    %s39 = sphi 0, %s23
    %s43 = sphi 0, %s43
    %s45 = sphi 0, %s43
    %s46 = sphi 0, %s45
    %s60 = sphi 0, %s46
    %s64 = sphi 0, %s64
    %s66 = sphi 0, %s64
    %s67 = sphi 0, %s66
    %s81 = sphi 0, %s67
    %s87 = sphi 0, %s89
    %s90 = sphi 0, %s87
    %s91 = sphi 0, %s90
    %s107 = sphi 0, %s91
  $region4: #{tpu_custom_call.1} parent=0 // loop_header_branch
    %12 = sbr.rel (%p10) target = $region8
  $region5: #{tpu_custom_call.1} parent=0 // loop_body
    %s14 = ssub.s32 %s9, 1
    %s15 = ssub.s32 %s9, 2
    %s16 = sadd.s32 %s9, 1
    %s17 = ssub.s32 %s9, %s16
    %p18 = scmp.eq.s32.totalorder %s17, 0
    %s20 = sadd.s32 %s19, 1
    %s21 = scalar_select %p18, %s19, %s20
    %p24 = pneg %p18
    %p25 = scmp.eq.s32.totalorder %s9, 1
    %p26 = por %p24, %p25
    %p27 = scmp.ne.s32.totalorder %s19, %s22
    %p28 = scmp.eq.s32.totalorder %s9, 0
    %p29 = por %p27, %p28
    %p30 = scmp.ne.s32.totalorder %s19, %s22
    %p31 = scmp.eq.s32.totalorder %s14, 1
    %p32 = por %p30, %p31
    %p33 = scmp.ne.s32.totalorder %s22, %s23
    %p34 = scmp.eq.s32.totalorder %s14, 0
    %p35 = por %p33, %p34
    %p36 = scmp.ne.s32.totalorder %s22, %s23
    %p37 = scmp.eq.s32.totalorder %s15, 1
    %p38 = por %p36, %p37
    %p40 = scmp.ne.s32.totalorder %s23, %s39
    %p41 = scmp.eq.s32.totalorder %s15, 0
    %p42 = por %p40, %p41
    %s44 = sadd.s32 %s43, 1
    %p47 = scmp.eq.s32.totalorder %s9, 1
    %p48 = scmp.ne.s32.totalorder %s43, %s45
    %p49 = scmp.eq.s32.totalorder %s9, 0
    %p50 = por %p48, %p49
    %p51 = scmp.ne.s32.totalorder %s43, %s45
    %p52 = scmp.eq.s32.totalorder %s14, 1
    %p53 = por %p51, %p52
    %p54 = scmp.ne.s32.totalorder %s45, %s46
    %p55 = scmp.eq.s32.totalorder %s14, 0
    %p56 = por %p54, %p55
    %p57 = scmp.ne.s32.totalorder %s45, %s46
    %p58 = scmp.eq.s32.totalorder %s15, 1
    %p59 = por %p57, %p58
    %p61 = scmp.ne.s32.totalorder %s46, %s60
    %p62 = scmp.eq.s32.totalorder %s15, 0
    %p63 = por %p61, %p62
    %s65 = sadd.s32 %s64, 1
    %p68 = scmp.eq.s32.totalorder %s9, 1
    %p69 = scmp.ne.s32.totalorder %s64, %s66
    %p70 = scmp.eq.s32.totalorder %s9, 0
    %p71 = por %p69, %p70
    %p72 = scmp.ne.s32.totalorder %s64, %s66
    %p73 = scmp.eq.s32.totalorder %s14, 1
    %p74 = por %p72, %p73
    %p75 = scmp.ne.s32.totalorder %s66, %s67
    %p76 = scmp.eq.s32.totalorder %s14, 0
    %p77 = por %p75, %p76
    %p78 = scmp.ne.s32.totalorder %s66, %s67
    %p79 = scmp.eq.s32.totalorder %s15, 1
    %p80 = por %p78, %p79
    %p82 = scmp.ne.s32.totalorder %s67, %s81
    %p83 = scmp.eq.s32.totalorder %s15, 0
    %p84 = por %p82, %p83
    %s85 = ssub.s32 %s9, %s16
    %p86 = scmp.eq.s32.totalorder %s85, 0
    %s88 = sadd.s32 %s87, 1
    %s89 = scalar_select %p86, %s87, %s88
    %p92 = pneg %p86
    %p93 = scmp.eq.s32.totalorder %s9, 1
    %p94 = por %p92, %p93
    %p95 = scmp.ne.s32.totalorder %s87, %s90
    %p96 = scmp.eq.s32.totalorder %s9, 0
    %p97 = por %p95, %p96
    %p98 = scmp.ne.s32.totalorder %s87, %s90
    %p99 = scmp.eq.s32.totalorder %s14, 1
    %p100 = por %p98, %p99
    %p101 = scmp.ne.s32.totalorder %s90, %s91
    %p102 = scmp.eq.s32.totalorder %s14, 0
    %p103 = por %p101, %p102
    %p104 = scmp.ne.s32.totalorder %s90, %s91
    %p105 = scmp.eq.s32.totalorder %s15, 1
    %p106 = por %p104, %p105
    %p108 = scmp.ne.s32.totalorder %s91, %s107
    %p109 = scmp.eq.s32.totalorder %s15, 0
    %p110 = por %p108, %p109
    %p111 = scmp.le.s32.totalorder 1, %s9
    %p112 = scmp.lt.s32.totalorder %s9, 3
    %p113 = pnand %p111, %p112
    %p114 = pneg %p113
    // Predicated region
    $region9: #{tpu_custom_call.1} parent=5 // pred_check
      _
    $region10: #{tpu_custom_call.1} parent=5 // pred_check_branch
      %116 = sbr.rel (%p113) target = $region12
    $region11: #{tpu_custom_call.1} parent=5 // pred_region
      %s117 = ssub.s32 %s9, 1
      // Predicated region
      $region13: #{tpu_custom_call.1} parent=11 // pred_check
        %p118 = pneg %p56
      $region14: #{tpu_custom_call.1} parent=11 // pred_check_branch
        %120 = sbr.rel (%p118) target = $region16
      $region15: #{tpu_custom_call.1} parent=11 // pred_region
        _
      $region16: #{tpu_custom_call.1} parent=11 // pred_fallthru
        _
      // Predicated region
      $region17: #{tpu_custom_call.1} parent=11 // pred_check
        %p121 = pneg %p77
      $region18: #{tpu_custom_call.1} parent=11 // pred_check_branch
        %123 = sbr.rel (%p121) target = $region20
      $region19: #{tpu_custom_call.1} parent=11 // pred_region
        _
      $region20: #{tpu_custom_call.1} parent=11 // pred_fallthru
        _
    $region12: #{tpu_custom_call.1} parent=5 // pred_fallthru
      _
    %p124 = scmp.lt.s32.totalorder %s9, 2
    // Predicated region
    $region21: #{tpu_custom_call.1} parent=5 // pred_check
      %p125 = pneg %p124
    $region22: #{tpu_custom_call.1} parent=5 // pred_check_branch
      %127 = sbr.rel (%p125) target = $region24
    $region23: #{tpu_custom_call.1} parent=5 // pred_region
      // Predicated region
      $region25: #{tpu_custom_call.1} parent=23 // pred_check
        %p128 = pneg %p29
      $region26: #{tpu_custom_call.1} parent=23 // pred_check_branch
        %130 = sbr.rel (%p128) target = $region28
      $region27: #{tpu_custom_call.1} parent=23 // pred_region
        %s131 = smul.u32 16, %s9
        %p132 = scmp.lt.s32.totalorder %s131, 31
        %s133 = scalar_select %p132, %s131, 31
        %s134 = smul.addr %s133, 8
        %s135 = scalar_lea.vmem %s0, %s134
        %s136 = smul.u32 16, %s9
      $region28: #{tpu_custom_call.1} parent=23 // pred_fallthru
        _
    $region24: #{tpu_custom_call.1} parent=5 // pred_fallthru
      _
    %p137 = scmp.le.s32.totalorder 1, %s9
    %p138 = scmp.lt.s32.totalorder %s9, 3
    %p139 = pnand %p137, %p138
    %p140 = pneg %p139
    // Predicated region
    $region29: #{tpu_custom_call.1} parent=5 // pred_check
      _
    $region30: #{tpu_custom_call.1} parent=5 // pred_check_branch
      %142 = sbr.rel (%p139) target = $region32
    $region31: #{tpu_custom_call.1} parent=5 // pred_region
      %s143 = ssub.s32 %s9, 1
      %s144 = smul.u32 16, %s14
      %p145 = scmp.lt.s32.totalorder %s144, 31
      %s146 = scalar_select %p145, %s144, 31
      %s147 = smul.addr %s146, 8
      %s148 = scalar_lea.vmem %s0, %s147
      %p149 = pneg %p35
      %p150 = pneg %p32
      %p151 = pneg %p56
      %p152 = pneg %p53
      %p153 = pneg %p77
      %p154 = pneg %p74
      %p155 = pneg %p103
      %p156 = pneg %p100
      %s157 = smul.u32 16, %s14
      %p158 = scmp.lt.s32.totalorder %s157, 31
      %s159 = scalar_select %p158, %s157, 31
      %s160 = smul.addr %s159, 8
      %s161 = scalar_lea.vmem %s3, %s160
      %s162 = smul.u32 16, %s14
      %p163 = scmp.lt.s32.totalorder %s162, 31
      %s164 = scalar_select %p163, %s162, 31
      %s165 = smul.addr %s164, 8
      %s166 = scalar_lea.vmem %s0, %s165
      %s167 = smul.u32 16, %s14
      %s168 = smul.u32 16, %s14
      %p169 = scmp.lt.s32.totalorder %s168, 31
      %s170 = scalar_select %p169, %s168, 31
      %s171 = smul.addr %s170, 8
      %s172 = scalar_lea.vmem %s3, %s171
      %s173 = smul.u32 16, %s14
      %v174 = vld [vmem:[%s166] sm:$0xff]
      %v175 = vld [vmem:[%s166 + $0x8] sm:$0xff]
      %v176 = vld [vmem:[%s166 + $0x10] sm:$0xff]
      %v177 = vld [vmem:[%s166 + $0x18] sm:$0xff]
      %v178 = vld [vmem:[%s166 + $0x20] sm:$0xff]
      %v179 = vld [vmem:[%s166 + $0x28] sm:$0xff]
      %v180 = vld [vmem:[%s166 + $0x30] sm:$0xff]
      %v181 = vld [vmem:[%s166 + $0x38] sm:$0xff]
      %v182 = vld [vmem:[%s166 + $0x40] sm:$0xff]
      %v183 = vld [vmem:[%s166 + $0x48] sm:$0xff]
      %v184 = vld [vmem:[%s166 + $0x50] sm:$0xff]
      %v185 = vld [vmem:[%s166 + $0x58] sm:$0xff]
      %v186 = vld [vmem:[%s166 + $0x60] sm:$0xff]
      %v187 = vld [vmem:[%s166 + $0x68] sm:$0xff]
      %v188 = vld [vmem:[%s166 + $0x70] sm:$0xff]
      %v189 = vld [vmem:[%s166 + $0x78] sm:$0xff]
      %v190 = vld [vmem:[%s1] sm:$0xff]
      %v191 = vld [vmem:[%s1 + $0x8] sm:$0xff]
      %v192 = vld [vmem:[%s2] sm:$0x1]
      %v194 = vperm.slane %v192, 0
      %vm196 = vcmask 261120
      %v198 = vsel %vm196, %v174, 0
      %v201 = vsel %vm196, %v175, 0
      %v204 = vsel %vm196, %v176, 0
      %v207 = vsel %vm196, %v177, 0
      %v210 = vsel %vm196, %v178, 0
      %v213 = vsel %vm196, %v179, 0
      %v216 = vsel %vm196, %v180, 0
      %v219 = vsel %vm196, %v181, 0
      %v222 = vsel %vm196, %v182, 0
      %v225 = vsel %vm196, %v183, 0
      %v228 = vsel %vm196, %v184, 0
      %v231 = vsel %vm196, %v185, 0
      %v234 = vsel %vm196, %v186, 0
      %v237 = vsel %vm196, %v187, 0
      %v240 = vsel %vm196, %v188, 0
      %v243 = vsel %vm196, %v189, 0
      %v246 = vsel %vm196, %v190, 0
      %v249 = vsel %vm196, %v191, 0
      %251 = vmatpush.xpose.msra.mxu0 0.0
      %252 = vmatpush.xpose.msra.mxu0 0.0
      %253 = vmatpush.xpose.msra.mxu0 0.0
      %254 = vmatpush.xpose.msra.mxu0 0.0
      %255 = vmatpush.xpose.msra.mxu0 0.0
      %256 = vmatpush.xpose.msra.mxu0 0.0
      %257 = vmatpush.xpose.msra.mxu0 0.0
      %258 = vmatpush.xpose.msra.mxu0 0.0
      %259 = vmatpush.xpose.msra.mxu0 0.0
      %260 = vmatpush.xpose.msra.mxu0 0.0
      %261 = vmatpush.xpose.msra.mxu0 0.0
      %262 = vmatpush.xpose.msra.mxu0 0.0
      %263 = vmatpush.xpose.msra.mxu0 0.0
      %264 = vmatpush.xpose.msra.mxu0 0.0
      %265 = vmatpush.xpose.msra.mxu0 %v249
      %266 = vmatpush.xpose.msra.mxu0 %v246
      %267 = vmatmul.f32.gmra.mxu0 %v198
      %v268 = vpop.f32.mrf.mxu0
      %v269 = vadd.f32 %v194, %v268
      %270 = vmatmul.f32.gmra.mxu0 %v201
      %v271 = vpop.f32.mrf.mxu0
      %v272 = vadd.f32 %v194, %v271
      %273 = vmatmul.f32.gmra.mxu0 %v204
      %v274 = vpop.f32.mrf.mxu0
      %v275 = vadd.f32 %v194, %v274
      %276 = vmatmul.f32.gmra.mxu0 %v207
      %v277 = vpop.f32.mrf.mxu0
      %v278 = vadd.f32 %v194, %v277
      %279 = vmatmul.f32.gmra.mxu0 %v210
      %v280 = vpop.f32.mrf.mxu0
      %v281 = vadd.f32 %v194, %v280
      %282 = vmatmul.f32.gmra.mxu0 %v213
      %v283 = vpop.f32.mrf.mxu0
      %v284 = vadd.f32 %v194, %v283
      %285 = vmatmul.f32.gmra.mxu0 %v216
      %v286 = vpop.f32.mrf.mxu0
      %v287 = vadd.f32 %v194, %v286
      %288 = vmatmul.f32.gmra.mxu0 %v219
      %v289 = vpop.f32.mrf.mxu0
      %v290 = vadd.f32 %v194, %v289
      %291 = vmatmul.f32.gmra.mxu0 %v222
      %v292 = vpop.f32.mrf.mxu0
      %v293 = vadd.f32 %v194, %v292
      %294 = vmatmul.f32.gmra.mxu0 %v225
      %v295 = vpop.f32.mrf.mxu0
      %v296 = vadd.f32 %v194, %v295
      %297 = vmatmul.f32.gmra.mxu0 %v228
      %v298 = vpop.f32.mrf.mxu0
      %v299 = vadd.f32 %v194, %v298
      %300 = vmatmul.f32.gmra.mxu0 %v231
      %v301 = vpop.f32.mrf.mxu0
      %v302 = vadd.f32 %v194, %v301
      %303 = vmatmul.f32.gmra.mxu0 %v234
      %v304 = vpop.f32.mrf.mxu0
      %v305 = vadd.f32 %v194, %v304
      %306 = vmatmul.f32.gmra.mxu0 %v237
      %v307 = vpop.f32.mrf.mxu0
      %v308 = vadd.f32 %v194, %v307
      %309 = vmatmul.f32.gmra.mxu0 %v240
      %v310 = vpop.f32.mrf.mxu0
      %v311 = vadd.f32 %v194, %v310
      %312 = vmatmul.f32.gmra.mxu0 %v243
      %v313 = vpop.f32.mrf.mxu0
      %v314 = vadd.f32 %v194, %v313
      %315 = vdwg.mxu0
      %v316 = vmul.f32 %v269, %v269
      %v317 = vmul.f32 %v272, %v272
      %v318 = vmul.f32 %v275, %v275
      %v319 = vmul.f32 %v278, %v278
      %v320 = vmul.f32 %v281, %v281
      %v321 = vmul.f32 %v284, %v284
      %v322 = vmul.f32 %v287, %v287
      %v323 = vmul.f32 %v290, %v290
      %v324 = vmul.f32 %v293, %v293
      %v325 = vmul.f32 %v296, %v296
      %v326 = vmul.f32 %v299, %v299
      %v327 = vmul.f32 %v302, %v302
      %v328 = vmul.f32 %v305, %v305
      %v329 = vmul.f32 %v308, %v308
      %v330 = vmul.f32 %v311, %v311
      %v331 = vmul.f32 %v314, %v314
      %vm332 = vcmask 130048
      %v333 = vsel %vm332, %v316, 0.0
      %334 = vadd.xlane.f32.xlu0 %v333
      %v335 = vpop.xlane.xlu0 %334
      %v336 = vsel %vm332, %v317, 0.0
      %337 = vadd.xlane.f32.xlu0 %v336
      %v338 = vpop.xlane.xlu0 %337
      %v339 = vsel %vm332, %v318, 0.0
      %340 = vadd.xlane.f32.xlu0 %v339
      %v341 = vpop.xlane.xlu0 %340
      %v342 = vsel %vm332, %v319, 0.0
      %343 = vadd.xlane.f32.xlu0 %v342
      %v344 = vpop.xlane.xlu0 %343
      %v345 = vsel %vm332, %v320, 0.0
      %346 = vadd.xlane.f32.xlu0 %v345
      %v347 = vpop.xlane.xlu0 %346
      %v348 = vsel %vm332, %v321, 0.0
      %349 = vadd.xlane.f32.xlu0 %v348
      %v350 = vpop.xlane.xlu0 %349
      %v351 = vsel %vm332, %v322, 0.0
      %352 = vadd.xlane.f32.xlu0 %v351
      %v353 = vpop.xlane.xlu0 %352
      %v354 = vsel %vm332, %v323, 0.0
      %355 = vadd.xlane.f32.xlu0 %v354
      %v356 = vpop.xlane.xlu0 %355
      %v357 = vsel %vm332, %v324, 0.0
      %358 = vadd.xlane.f32.xlu0 %v357
      %v359 = vpop.xlane.xlu0 %358
      %v360 = vsel %vm332, %v325, 0.0
      %361 = vadd.xlane.f32.xlu0 %v360
      %v362 = vpop.xlane.xlu0 %361
      %v363 = vsel %vm332, %v326, 0.0
      %364 = vadd.xlane.f32.xlu0 %v363
      %v365 = vpop.xlane.xlu0 %364
      %v366 = vsel %vm332, %v327, 0.0
      %367 = vadd.xlane.f32.xlu0 %v366
      %v368 = vpop.xlane.xlu0 %367
      %v369 = vsel %vm332, %v328, 0.0
      %370 = vadd.xlane.f32.xlu0 %v369
      %v371 = vpop.xlane.xlu0 %370
      %v372 = vsel %vm332, %v329, 0.0
      %373 = vadd.xlane.f32.xlu0 %v372
      %v374 = vpop.xlane.xlu0 %373
      %v375 = vsel %vm332, %v330, 0.0
      %376 = vadd.xlane.f32.xlu0 %v375
      %v377 = vpop.xlane.xlu0 %376
      %v378 = vsel %vm332, %v331, 0.0
      %379 = vadd.xlane.f32.xlu0 %v378
      %v380 = vpop.xlane.xlu0 %379
      %v381 = vmax.f32 %v335, 1e-24
      %v382 = vmax.f32 %v338, 1e-24
      %v383 = vmax.f32 %v341, 1e-24
      %v384 = vmax.f32 %v344, 1e-24
      %v385 = vmax.f32 %v347, 1e-24
      %v386 = vmax.f32 %v350, 1e-24
      %v387 = vmax.f32 %v353, 1e-24
      %v388 = vmax.f32 %v356, 1e-24
      %v389 = vmax.f32 %v359, 1e-24
      %v390 = vmax.f32 %v362, 1e-24
      %v391 = vmax.f32 %v365, 1e-24
      %v392 = vmax.f32 %v368, 1e-24
      %v393 = vmax.f32 %v371, 1e-24
      %v394 = vmax.f32 %v374, 1e-24
      %v395 = vmax.f32 %v377, 1e-24
      %v396 = vmax.f32 %v380, 1e-24
      %v397 = vrsqrt.pop %v381
      %v398 = vmul.f32 %v397, %v381
      %v399 = vmul.f32 %v398, %v397
      %v400 = vmul.f32 0.5, %v399
      %v401 = vsub.f32 1.5, %v400
      %v402 = vmul.f32 %v397, %v401
      %vm403 = vweird.f32 %v381
      %vm404 = vweird.f32 %v397
      %vm405 = vmor %vm403, %vm404
      %v406 = vsel %vm405, %v397, %v402
      %v407 = vrsqrt.pop %v382
      %v408 = vmul.f32 %v407, %v382
      %v409 = vmul.f32 %v408, %v407
      %v410 = vmul.f32 0.5, %v409
      %v411 = vsub.f32 1.5, %v410
      %v412 = vmul.f32 %v407, %v411
      %vm413 = vweird.f32 %v382
      %vm414 = vweird.f32 %v407
      %vm415 = vmor %vm413, %vm414
      %v416 = vsel %vm415, %v407, %v412
      %v417 = vrsqrt.pop %v383
      %v418 = vmul.f32 %v417, %v383
      %v419 = vmul.f32 %v418, %v417
      %v420 = vmul.f32 0.5, %v419
      %v421 = vsub.f32 1.5, %v420
      %v422 = vmul.f32 %v417, %v421
      %vm423 = vweird.f32 %v383
      %vm424 = vweird.f32 %v417
      %vm425 = vmor %vm423, %vm424
      %v426 = vsel %vm425, %v417, %v422
      %v427 = vrsqrt.pop %v384
      %v428 = vmul.f32 %v427, %v384
      %v429 = vmul.f32 %v428, %v427
      %v430 = vmul.f32 0.5, %v429
      %v431 = vsub.f32 1.5, %v430
      %v432 = vmul.f32 %v427, %v431
      %vm433 = vweird.f32 %v384
      %vm434 = vweird.f32 %v427
      %vm435 = vmor %vm433, %vm434
      %v436 = vsel %vm435, %v427, %v432
      %v437 = vrsqrt.pop %v385
      %v438 = vmul.f32 %v437, %v385
      %v439 = vmul.f32 %v438, %v437
      %v440 = vmul.f32 0.5, %v439
      %v441 = vsub.f32 1.5, %v440
      %v442 = vmul.f32 %v437, %v441
      %vm443 = vweird.f32 %v385
      %vm444 = vweird.f32 %v437
      %vm445 = vmor %vm443, %vm444
      %v446 = vsel %vm445, %v437, %v442
      %v447 = vrsqrt.pop %v386
      %v448 = vmul.f32 %v447, %v386
      %v449 = vmul.f32 %v448, %v447
      %v450 = vmul.f32 0.5, %v449
      %v451 = vsub.f32 1.5, %v450
      %v452 = vmul.f32 %v447, %v451
      %vm453 = vweird.f32 %v386
      %vm454 = vweird.f32 %v447
      %vm455 = vmor %vm453, %vm454
      %v456 = vsel %vm455, %v447, %v452
      %v457 = vrsqrt.pop %v387
      %v458 = vmul.f32 %v457, %v387
      %v459 = vmul.f32 %v458, %v457
      %v460 = vmul.f32 0.5, %v459
      %v461 = vsub.f32 1.5, %v460
      %v462 = vmul.f32 %v457, %v461
      %vm463 = vweird.f32 %v387
      %vm464 = vweird.f32 %v457
      %vm465 = vmor %vm463, %vm464
      %v466 = vsel %vm465, %v457, %v462
      %v467 = vrsqrt.pop %v388
      %v468 = vmul.f32 %v467, %v388
      %v469 = vmul.f32 %v468, %v467
      %v470 = vmul.f32 0.5, %v469
      %v471 = vsub.f32 1.5, %v470
      %v472 = vmul.f32 %v467, %v471
      %vm473 = vweird.f32 %v388
      %vm474 = vweird.f32 %v467
      %vm475 = vmor %vm473, %vm474
      %v476 = vsel %vm475, %v467, %v472
      %v477 = vrsqrt.pop %v389
      %v478 = vmul.f32 %v477, %v389
      %v479 = vmul.f32 %v478, %v477
      %v480 = vmul.f32 0.5, %v479
      %v481 = vsub.f32 1.5, %v480
      %v482 = vmul.f32 %v477, %v481
      %vm483 = vweird.f32 %v389
      %vm484 = vweird.f32 %v477
      %vm485 = vmor %vm483, %vm484
      %v486 = vsel %vm485, %v477, %v482
      %v487 = vrsqrt.pop %v390
      %v488 = vmul.f32 %v487, %v390
      %v489 = vmul.f32 %v488, %v487
      %v490 = vmul.f32 0.5, %v489
      %v491 = vsub.f32 1.5, %v490
      %v492 = vmul.f32 %v487, %v491
      %vm493 = vweird.f32 %v390
      %vm494 = vweird.f32 %v487
      %vm495 = vmor %vm493, %vm494
      %v496 = vsel %vm495, %v487, %v492
      %v497 = vrsqrt.pop %v391
      %v498 = vmul.f32 %v497, %v391
      %v499 = vmul.f32 %v498, %v497
      %v500 = vmul.f32 0.5, %v499
      %v501 = vsub.f32 1.5, %v500
      %v502 = vmul.f32 %v497, %v501
      %vm503 = vweird.f32 %v391
      %vm504 = vweird.f32 %v497
      %vm505 = vmor %vm503, %vm504
      %v506 = vsel %vm505, %v497, %v502
      %v507 = vrsqrt.pop %v392
      %v508 = vmul.f32 %v507, %v392
      %v509 = vmul.f32 %v508, %v507
      %v510 = vmul.f32 0.5, %v509
      %v511 = vsub.f32 1.5, %v510
      %v512 = vmul.f32 %v507, %v511
      %vm513 = vweird.f32 %v392
      %vm514 = vweird.f32 %v507
      %vm515 = vmor %vm513, %vm514
      %v516 = vsel %vm515, %v507, %v512
      %v517 = vrsqrt.pop %v393
      %v518 = vmul.f32 %v517, %v393
      %v519 = vmul.f32 %v518, %v517
      %v520 = vmul.f32 0.5, %v519
      %v521 = vsub.f32 1.5, %v520
      %v522 = vmul.f32 %v517, %v521
      %vm523 = vweird.f32 %v393
      %vm524 = vweird.f32 %v517
      %vm525 = vmor %vm523, %vm524
      %v526 = vsel %vm525, %v517, %v522
      %v527 = vrsqrt.pop %v394
      %v528 = vmul.f32 %v527, %v394
      %v529 = vmul.f32 %v528, %v527
      %v530 = vmul.f32 0.5, %v529
      %v531 = vsub.f32 1.5, %v530
      %v532 = vmul.f32 %v527, %v531
      %vm533 = vweird.f32 %v394
      %vm534 = vweird.f32 %v527
      %vm535 = vmor %vm533, %vm534
      %v536 = vsel %vm535, %v527, %v532
      %v537 = vrsqrt.pop %v395
      %v538 = vmul.f32 %v537, %v395
      %v539 = vmul.f32 %v538, %v537
      %v540 = vmul.f32 0.5, %v539
      %v541 = vsub.f32 1.5, %v540
      %v542 = vmul.f32 %v537, %v541
      %vm543 = vweird.f32 %v395
      %vm544 = vweird.f32 %v537
      %vm545 = vmor %vm543, %vm544
      %v546 = vsel %vm545, %v537, %v542
      %v547 = vrsqrt.pop %v396
      %v548 = vmul.f32 %v547, %v396
      %v549 = vmul.f32 %v548, %v547
      %v550 = vmul.f32 0.5, %v549
      %v551 = vsub.f32 1.5, %v550
      %v552 = vmul.f32 %v547, %v551
      %vm553 = vweird.f32 %v396
      %vm554 = vweird.f32 %v547
      %vm555 = vmor %vm553, %vm554
      %v556 = vsel %vm555, %v547, %v552
      %v557 = vmul.f32 %v269, %v406
      %v558 = vmul.f32 %v272, %v416
      %v559 = vmul.f32 %v275, %v426
      %v560 = vmul.f32 %v278, %v436
      %v561 = vmul.f32 %v281, %v446
      %v562 = vmul.f32 %v284, %v456
      %v563 = vmul.f32 %v287, %v466
      %v564 = vmul.f32 %v290, %v476
      %v565 = vmul.f32 %v293, %v486
      %v566 = vmul.f32 %v296, %v496
      %v567 = vmul.f32 %v299, %v506
      %v568 = vmul.f32 %v302, %v516
      %v569 = vmul.f32 %v305, %v526
      %v570 = vmul.f32 %v308, %v536
      %v571 = vmul.f32 %v311, %v546
      %v572 = vmul.f32 %v314, %v556
      %573 = vst.msk [vmem:[%s172] sm:$0xff] %vm332, %v557
      %574 = vst.msk [vmem:[%s172 + $0x8] sm:$0xff] %vm332, %v558
      %575 = vst.msk [vmem:[%s172 + $0x10] sm:$0xff] %vm332, %v559
      %576 = vst.msk [vmem:[%s172 + $0x18] sm:$0xff] %vm332, %v560
      %577 = vst.msk [vmem:[%s172 + $0x20] sm:$0xff] %vm332, %v561
      %578 = vst.msk [vmem:[%s172 + $0x28] sm:$0xff] %vm332, %v562
      %579 = vst.msk [vmem:[%s172 + $0x30] sm:$0xff] %vm332, %v563
      %580 = vst.msk [vmem:[%s172 + $0x38] sm:$0xff] %vm332, %v564
      %581 = vst.msk [vmem:[%s172 + $0x40] sm:$0xff] %vm332, %v565
      %582 = vst.msk [vmem:[%s172 + $0x48] sm:$0xff] %vm332, %v566
      %583 = vst.msk [vmem:[%s172 + $0x50] sm:$0xff] %vm332, %v567
      %584 = vst.msk [vmem:[%s172 + $0x58] sm:$0xff] %vm332, %v568
      %585 = vst.msk [vmem:[%s172 + $0x60] sm:$0xff] %vm332, %v569
      %586 = vst.msk [vmem:[%s172 + $0x68] sm:$0xff] %vm332, %v570
      %587 = vst.msk [vmem:[%s172 + $0x70] sm:$0xff] %vm332, %v571
      %588 = vst.msk [vmem:[%s172 + $0x78] sm:$0xff] %vm332, %v572
      %s589 = smul.u32 16, %s14
      %p590 = scmp.lt.s32.totalorder %s589, 31
      %s591 = scalar_select %p590, %s589, 31
      %s592 = smul.addr %s591, 8
      %s593 = scalar_lea.vmem %s3, %s592
      // Predicated region
      $region33: #{tpu_custom_call.1} parent=31 // pred_check
        %p594 = pneg %p100
      $region34: #{tpu_custom_call.1} parent=31 // pred_check_branch
        %596 = sbr.rel (%p594) target = $region36
      $region35: #{tpu_custom_call.1} parent=31 // pred_region
        %s597 = smul.u32 16, %s14
      $region36: #{tpu_custom_call.1} parent=31 // pred_fallthru
        _
    $region32: #{tpu_custom_call.1} parent=5 // pred_fallthru
      _
    %p598 = scmp.le.s32.totalorder 2, %s9
    // Predicated region
    $region37: #{tpu_custom_call.1} parent=5 // pred_check
      %p599 = pneg %p598
    $region38: #{tpu_custom_call.1} parent=5 // pred_check_branch
      %601 = sbr.rel (%p599) target = $region40
    $region39: #{tpu_custom_call.1} parent=5 // pred_region
      %s602 = ssub.s32 %s9, 2
      // Predicated region
      $region41: #{tpu_custom_call.1} parent=39 // pred_check
        %p603 = pneg %p106
      $region42: #{tpu_custom_call.1} parent=39 // pred_check_branch
        %605 = sbr.rel (%p603) target = $region44
      $region43: #{tpu_custom_call.1} parent=39 // pred_region
        %s606 = smul.u32 16, %s15
        %p607 = scmp.lt.s32.totalorder %s606, 31
        %s608 = scalar_select %p607, %s606, 31
        %s609 = smul.addr %s608, 8
        %s610 = scalar_lea.vmem %s3, %s609
      $region44: #{tpu_custom_call.1} parent=39 // pred_fallthru
        _
    $region40: #{tpu_custom_call.1} parent=5 // pred_fallthru
      _
  $region6: #{tpu_custom_call.1} parent=0 // loop_footer
    %s13 = sadd.s32 1, %s9
  $region7: #{tpu_custom_call.1} parent=0 // loop_footer_branch
    %8 = sbr.rel target = $region3
  $region8: #{tpu_custom_call.1} parent=0 // loop_exit
    _

</llo_original>
